<compile_context>
chip_gen: v6e
topology: v6e:2x2x1
jax: 0.10.0
libtpu: 0.0.40
codegen_flags: <defaults>
</compile_context>

<pallas_src>
import functools

import jax
import jax.numpy as jnp
from jax.experimental import pallas as pl
from jax.experimental.pallas import tpu as pltpu


# ---------------------------------------------------------------------------
# Tile planning
# ---------------------------------------------------------------------------
_TM_TARGET = 1024       # output-tile rows   (multiple of 128, good for all MXUs)
_TN_TARGET = 1024       # output-tile cols   (lane axis, multiple of 128)
_TK_TILE = 512          # K tile when K has to be split over a grid axis
_TK_SINGLE_MAX = 2048   # largest K kept as a single resident block (fp32-safe)


def _round_up(x, m):
    return -(-x // m) * m


def _plan_m(m):
    """-> (tm, Mp). Full-dim block when M fits; else 1024-row tiles (padded)."""
    if m <= _TM_TARGET:
        return m, m
    return _TM_TARGET, _round_up(m, _TM_TARGET)


def _plan_n(n):
    """-> (tn, Np). Pad small N to 128 (lane-dense stores); full block up to the
    target; otherwise 512/1024-wide tiles with <=511 columns of one-time pad."""
    if n <= 128:
        return 128, 128
    if n <= _TN_TARGET:
        return n, n
    np_ = _round_up(n, _TK_TILE)
    if np_ % _TN_TARGET == 0:
        return _TN_TARGET, np_
    return _TK_TILE, np_


def _plan_k(k):
    """-> (tk, Kp, single_k). Collapse the K axis entirely when K fits."""
    if k <= _TK_SINGLE_MAX:
        return k, k, True
    return _TK_TILE, _round_up(k, _TK_TILE), False


@functools.lru_cache(maxsize=None)
def _vmem_limit_bytes():
    # Generation-aware scoped-VMEM budget: 3/4 of physical, capped at 100 MiB
    # (v5e/v6e: 128 MiB physical -> 96 MiB; v7x: 64 MiB physical -> 48 MiB).
    phys = 64 * 1024 * 1024  # conservative fallback == v7x physical VMEM
    try:
        phys = int(pltpu.get_tpu_info().vmem_capacity_bytes)
    except Exception:
        pass
    return int(min(phys * 3 // 4, 100 * 1024 * 1024))


# ---------------------------------------------------------------------------
# Kernels
# ---------------------------------------------------------------------------
def _mm_bias_kernel(x_ref, w_ref, b_ref, o_ref):
    """Single-K block: one MXU pass per (tm, tn) output tile + fused bias."""
    acc = jnp.dot(x_ref[...].astype(w_ref.dtype), w_ref[...],
                  preferred_element_type=jnp.float32)
    o_ref[...] = (acc + b_ref[...].astype(jnp.float32)).astype(o_ref.dtype)


def _mm_kernel(x_ref, w_ref, o_ref):
    acc = jnp.dot(x_ref[...].astype(w_ref.dtype), w_ref[...],
                  preferred_element_type=jnp.float32)
    o_ref[...] = acc.astype(o_ref.dtype)


def _mm_bias_acc_kernel(x_ref, w_ref, b_ref, o_ref, acc_ref):
    """Tiled-K: f32 VMEM accumulator over the (innermost) K grid axis."""
    @pl.when(pl.program_id(2) == 0)
    def _():
        acc_ref[...] = jnp.zeros_like(acc_ref)

    acc_ref[...] += jnp.dot(x_ref[...].astype(w_ref.dtype), w_ref[...],
                            preferred_element_type=jnp.float32)

    @pl.when(pl.program_id(2) == pl.num_programs(2) - 1)
    def _():
        o_ref[...] = (acc_ref[...] + b_ref[...].astype(jnp.float32)).astype(o_ref.dtype)


def _mm_acc_kernel(x_ref, w_ref, o_ref, acc_ref):
    @pl.when(pl.program_id(2) == 0)
    def _():
        acc_ref[...] = jnp.zeros_like(acc_ref)

    acc_ref[...] += jnp.dot(x_ref[...].astype(w_ref.dtype), w_ref[...],
                            preferred_element_type=jnp.float32)

    @pl.when(pl.program_id(2) == pl.num_programs(2) - 1)
    def _():
        o_ref[...] = acc_ref[...].astype(o_ref.dtype)


# ---------------------------------------------------------------------------
# 2-D linear: (M, K) @ (Kp, Np) [+ (1, Np)] with pre-padded weight/bias
# ---------------------------------------------------------------------------
@functools.partial(jax.jit, static_argnames=("out_n", "out_dtype"))
def _linear_2d(x2d, w_pad, b_row, out_n, out_dtype):
    M, K = x2d.shape
    Kp, Np = w_pad.shape

    tm, Mp = _plan_m(M)
    tn, np_check = _plan_n(out_n)
    tk, kp_check, single_k = _plan_k(K)
    assert np_check == Np and kp_check == Kp

    # Pad x only when strictly required (zero-padding K is exact).
    if Mp != M or Kp != K:
        x2d = jnp.pad(x2d, ((0, Mp - M), (0, Kp - K)))

    grid_m, grid_n = Mp // tm, Np // tn

    # v7x has 2 TensorCores sharded over the "parallel" axes: make sure there
    # are >= 2 parallel blocks when the whole problem would fit a single tile.
    if grid_m * grid_n == 1 and Np >= 256 and (Np // 2) % 128 == 0:
        tn = Np // 2
        grid_n = 2

    has_bias = b_row is not None

    if single_k:
        # K collapsed: no accumulator, no pl.when phases. x's block index is
        # constant over j, so each x tile is DMA'd from HBM exactly once.
        grid = (grid_m, grid_n)
        in_specs = [
            pl.BlockSpec((tm, Kp), lambda i, j: (i, 0)),
            pl.BlockSpec((Kp, tn), lambda i, j: (0, j)),
        ]
        operands = [x2d, w_pad]
        if has_bias:
            in_specs.append(pl.BlockSpec((1, tn), lambda i, j: (0, j)))
            operands.append(b_row)
            kernel = _mm_bias_kernel
        else:
            kernel = _mm_kernel
        out_specs = pl.BlockSpec((tm, tn), lambda i, j: (i, j))
        scratch = []
        semantics = ("parallel", "parallel")
        x_reads = 1
    else:
        grid = (grid_m, grid_n, Kp // tk)
        in_specs = [
            pl.BlockSpec((tm, tk), lambda i, j, k: (i, k)),
            pl.BlockSpec((tk, tn), lambda i, j, k: (k, j)),
        ]
        operands = [x2d, w_pad]
        if has_bias:
            in_specs.append(pl.BlockSpec((1, tn), lambda i, j, k: (0, j)))
            operands.append(b_row)
            kernel = _mm_bias_acc_kernel
        else:
            kernel = _mm_acc_kernel
        out_specs = pl.BlockSpec((tm, tn), lambda i, j, k: (i, j))
        scratch = [pltpu.VMEM((tm, tn), jnp.float32)]
        semantics = ("parallel", "parallel", "arbitrary")
        x_reads = grid_n
    # NOTE: pipeline_mode=pl.Buffered(3) on the weight BlockSpec could further
    # hide DMA latency for tiny-M (decode-like) shapes; left at the default
    # double-buffering here.

    x_item = jnp.dtype(x2d.dtype).itemsize
    w_item = jnp.dtype(w_pad.dtype).itemsize
    cost = pl.CostEstimate(
        flops=2 * Mp * Np * Kp,
        transcendentals=0,
        bytes_accessed=(x_item * Mp * Kp * x_reads
                        + w_item * Kp * Np * grid_m
                        + jnp.dtype(out_dtype).itemsize * Mp * Np),
    )

    out = pl.pallas_call(
        kernel,
        out_shape=jax.ShapeDtypeStruct((Mp, Np), out_dtype),
        grid_spec=pltpu.PrefetchScalarGridSpec(
            num_scalar_prefetch=0,
            grid=grid,
            in_specs=in_specs,
            out_specs=out_specs,
            scratch_shapes=scratch,
        ),
        compiler_params=pltpu.CompilerParams(
            dimension_semantics=semantics,
            vmem_limit_bytes=_vmem_limit_bytes(),
        ),
        cost_estimate=cost,
    )(*operands)

    if Mp != M or Np != out_n:
        out = out[:M, :out_n]
    return out


# ---------------------------------------------------------------------------
# Module wrapper (matches fqdd/nnets/linear.py::Linear forward semantics)
# ---------------------------------------------------------------------------
class PallasLinear:
    """JAX/Pallas port of the SpeechBrain-style Linear module."""

    def __init__(self, n_neurons, input_shape=None, input_size=None, bias=True,
                 combine_dims=False, key=None, dtype=jnp.float32,
                 compute_dtype=None):
        self.combine_dims = combine_dims
        if input_shape is None and input_size is None:
            raise ValueError("Expected one of input_shape or input_size")
        if input_size is None:
            input_size = input_shape[-1]
            if len(input_shape) == 4 and self.combine_dims:
                input_size = input_shape[2] * input_shape[3]
        self.input_size = int(input_size)
        self.n_neurons = int(n_neurons)
        self.has_bias = bool(bias)
        # Optional reduced-precision MXU path (bf16 on v6e/v7x). Default keeps
        # exact fp32 torch.nn.Linear semantics; accumulation is fp32 either way.
        self.compute_dtype = dtype if compute_dtype is None else compute_dtype

        if key is None:
            key = jax.random.PRNGKey(0)
        kw, kb = jax.random.split(key)
        bound = 1.0 / float(self.input_size) ** 0.5

        # PyTorch nn.Linear layout (out_features, in_features); used once here.
        w = jax.random.uniform(kw, (self.n_neurons, self.input_size), dtype=dtype,
                               minval=-bound, maxval=bound)

        _, self._Np = _plan_n(self.n_neurons)
        _, self._Kp, _ = _plan_k(self.input_size)

        # Pre-transpose to (K, N) and zero-pad to tile multiples ONCE: the padded
        # transposed tensor is the only stored copy of the parameter.
        w_t = w.T.astype(self.compute_dtype)
        self.w_pad = jnp.pad(
            w_t,
            ((0, self._Kp - self.input_size), (0, self._Np - self.n_neurons)),
        )

        if bias:
            b = jax.random.uniform(kb, (self.n_neurons,), dtype=dtype,
                                   minval=-bound, maxval=bound)
            self.b_pad = jnp.pad(
                b.astype(jnp.float32), (0, self._Np - self.n_neurons)
            ).reshape(1, -1)
        else:
            self.b_pad = None

    # Reference-layout views (computed on demand; no duplicate copy stored).
    @property
    def weight(self):
        return self.w_pad[: self.input_size, : self.n_neurons].T

    @property
    def bias(self):
        if self.b_pad is None:
            return None
        return self.b_pad[0, : self.n_neurons]

    def __call__(self, x):
        if x.ndim == 4 and self.combine_dims:
            x = x.reshape(x.shape[0], x.shape[1], x.shape[2] * x.shape[3])
        lead_shape = x.shape[:-1]
        x2d = x.reshape(-1, x.shape[-1])
        out2d = _linear_2d(x2d, self.w_pad, self.b_pad,
                           out_n=self.n_neurons, out_dtype=x.dtype)
        return out2d.reshape(*lead_shape, self.n_neurons)


if __name__ == "__main__":
    key = jax.random.PRNGKey(0)
    kx, kp, kp2, kp3, kx4 = jax.random.split(key, 5)

    # Small shapes consistent with the module example: (batch, seq, feat)
    batch, seq, hidden, n_neurons = 2, 8, 32, 64
    x = jax.random.normal(kx, (batch, seq, hidden), dtype=jnp.float32)

    # With bias
    lin = PallasLinear(
        n_neurons=n_neurons, input_shape=(batch, seq, hidden), bias=True, key=kp
    )
    y = jax.block_until_ready(lin(x))
    y_ref = x @ lin.weight.T + lin.bias
    assert y.shape == (batch, seq, n_neurons), y.shape
    assert jnp.allclose(y, y_ref, atol=1e-4, rtol=1e-4), float(
        jnp.max(jnp.abs(y - y_ref))
    )

    # Without bias (exercises the bias-free kernel path)
    lin_nb = PallasLinear(n_neurons=48, input_size=hidden, bias=False, key=kp2)
    y2 = jax.block_until_ready(lin_nb(x))
    y2_ref = x @ lin_nb.weight.T
    assert y2.shape == (batch, seq, 48), y2.shape
    assert jnp.allclose(y2, y2_ref, atol=1e-4, rtol=1e-4), float(
        jnp.max(jnp.abs(y2 - y2_ref))
    )

    # 4-D input with combine_dims=True (3rd/4th dims folded into the feature dim)
    x4 = jax.random.normal(kx4, (batch, seq, 4, 8), dtype=jnp.float32)
    lin_cd = PallasLinear(
        n_neurons=n_neurons, input_shape=(batch, seq, 4, 8), bias=True,
        combine_dims=True, key=kp3,
    )
    y3 = jax.block_until_ready(lin_cd(x4))
    y3_ref = x4.reshape(batch, seq, 32) @ lin_cd.weight.T + lin_cd.bias
    assert y3.shape == (batch, seq, n_neurons), y3.shape
    assert jnp.allclose(y3, y3_ref, atol=1e-4, rtol=1e-4), float(
        jnp.max(jnp.abs(y3 - y3_ref))
    )

    print("KERNEL_OK")
</pallas_src>

<mosaic_0001>
module attributes {stable_mosaic.version = 11 : i64} {
  func.func @_mm_bias_kernel(%arg0: i32, %arg1: i32, %arg2: memref<16x32xf32, #tpu.memory_space<vmem>>, %arg3: memref<32x128xf32, #tpu.memory_space<vmem>>, %arg4: memref<1x128xf32, #tpu.memory_space<vmem>>, %arg5: memref<16x128xf32, #tpu.memory_space<vmem>>) attributes {dimension_semantics = [#tpu.dimension_semantics<parallel>, #tpu.dimension_semantics<parallel>], iteration_bounds = array<i64: 1, 1>, scalar_prefetch = 0 : i64, scratch_operands = 0 : i64, tpu.core_type = #tpu.core_type<tc>, window_params = [{transform_indices = @transform_0, window_bounds = array<i64: 16, 32>}, {transform_indices = @transform_1, window_bounds = array<i64: 32, 128>}, {transform_indices = @transform_2, window_bounds = array<i64: 1, 128>}, {transform_indices = @transform_3, window_bounds = array<i64: 16, 128>}]} {
    %c0 = arith.constant 0 : index
    %c0_0 = arith.constant 0 : index
    %0 = vector.load %arg2[%c0, %c0_0] : memref<16x32xf32, #tpu.memory_space<vmem>>, vector<16x32xf32>
    %c0_1 = arith.constant 0 : index
    %c0_2 = arith.constant 0 : index
    %1 = vector.load %arg3[%c0_1, %c0_2] : memref<32x128xf32, #tpu.memory_space<vmem>>, vector<32x128xf32>
    %cst = arith.constant dense<0.000000e+00> : vector<16x128xf32>
    %2 = tpu.matmul %0, %1, %cst {dimension_numbers = #tpu.dot_dimension_numbers<[1], [0], [0], [1], [0, 0, 1, 1], [], []>} : vector<16x32xf32>, vector<32x128xf32>, vector<16x128xf32> -> vector<16x128xf32>
    %c0_3 = arith.constant 0 : index
    %c0_4 = arith.constant 0 : index
    %3 = vector.load %arg4[%c0_3, %c0_4] : memref<1x128xf32, #tpu.memory_space<vmem>>, vector<1x128xf32>
    %4 = vector.broadcast %3 : vector<1x128xf32> to vector<16x128xf32>
    %5 = arith.addf %2, %4 : vector<16x128xf32>
    %c0_5 = arith.constant 0 : index
    %c0_6 = arith.constant 0 : index
    %6 = vector.load %arg5[%c0_5, %c0_6] : memref<16x128xf32, #tpu.memory_space<vmem>>, vector<16x128xf32>
    tpu.vector_store %arg5[%c0_5, %c0_6], %5 {strides = array<i32>} : memref<16x128xf32, #tpu.memory_space<vmem>>, vector<16x128xf32>,
    return
  }
  func.func @transform_0(%arg0: i32, %arg1: i32) -> (i32, i32) {
    %c0_i32 = arith.constant 0 : i32
    %c0_i32_0 = arith.constant 0 : i32
    return %arg0, %c0_i32 : i32, i32
  }
  func.func @transform_1(%arg0: i32, %arg1: i32) -> (i32, i32) {
    %c0_i32 = arith.constant 0 : i32
    %c0_i32_0 = arith.constant 0 : i32
    return %c0_i32, %arg1 : i32, i32
  }
  func.func @transform_2(%arg0: i32, %arg1: i32) -> (i32, i32) {
    %c0_i32 = arith.constant 0 : i32
    %c0_i32_0 = arith.constant 0 : i32
    return %c0_i32, %arg1 : i32, i32
  }
  func.func @transform_3(%arg0: i32, %arg1: i32) -> (i32, i32) {
    %c0_i32 = arith.constant 0 : i32
    return %arg0, %arg1 : i32, i32
  }
}

</mosaic_0001>

<llo_original>
// kernel: _linear_2d.1
$region0: #{_linear_2d.1}
  #allocation0 [shape = 'u32[]', space=smem, size = 0x4, offset = 0x4, fixed_abs, tag = 'smem constant byte address 0x4 - core index']
  #allocation1 [shape = 'u32[144,128]{1,0:T(1,128)}', space=vmem, size = 0x12000, scoped, tag = 'internal scratch']
  %s0 = inlined_call_operand.hbm [shape: f32[16,32], index: 0, kind: input, shape index: {}]
  %s1 = inlined_call_operand.hbm [shape: f32[32,128], index: 1, kind: input, shape index: {}]
  %s2 = inlined_call_operand.vmem [shape: f32[1,128], index: 2, kind: input, shape index: {}]
  %s3 = inlined_call_operand.hbm [shape: f32[16,128], index: 3, kind: output, shape index: {}]
  %s4 = sld [smem:[#allocation0]]
  $region30: #{_linear_2d.1} parent=0
    _
  %s6 = ssub.s32 1, %s4
  %s7 = scalar_select 0, %s6, %s4
  $region1: #{_linear_2d.1} parent=0
    #allocation2 [shape = 'u8[8192]{0}', space=vmem, size = 0x2000, scoped, tag = 'input window, operand 0, single buffered']
    #allocation3 [shape = 's32[1]{0}', space=sflag, size = 0x4, scoped, tag = 'scoped memory for _linear_2d.1']
    #allocation4 [shape = 's32[1]{0}', space=sflag, size = 0x4, scoped, tag = 'scoped memory for _linear_2d.1']
    #allocation5 [shape = 'u8[16384]{0}', space=vmem, size = 0x4000, scoped, tag = 'input window, operand 1, single buffered']
    #allocation6 [shape = 's32[1]{0}', space=sflag, size = 0x4, scoped, tag = 'scoped memory for _linear_2d.1']
    #allocation7 [shape = 'u8[8192]{0}', space=vmem, size = 0x2000, scoped, tag = 'output window, operand 0, single buffered']
    %8 = vsyncpa [#allocation3], 0
    %9 = vsyncpa [#allocation6], 0
    %10 = vsyncpa [#allocation4], 0
    // Predicated region
    $region2: #{_linear_2d.1} parent=1 // pred_check
      _
    $region3: #{_linear_2d.1} parent=1 // pred_check_branch
      %12 = sbr.rel (0) target = $region5
    $region4: #{_linear_2d.1} parent=1 // pred_region
      %s14 = ssub.s32 256, 256
      %15 = vsyncadd [#allocation3], %s14
      %s16 = sshll.u32 [#allocation2], 4
      %s17 = int_to_ptr.vmem [resolvable:$true] %s16
      %22 = dma.hbm_to_vmem [thread:$0]  %s0, 256, %s17, [#allocation3], 128, 128, 8
    $region5: #{_linear_2d.1} parent=1 // pred_fallthru
      _
    // Predicated region
    $region6: #{_linear_2d.1} parent=1 // pred_check
      _
    $region7: #{_linear_2d.1} parent=1 // pred_check_branch
      %24 = sbr.rel (0) target = $region9
    $region8: #{_linear_2d.1} parent=1 // pred_region
      %s26 = ssub.s32 512, 512
      %27 = vsyncadd [#allocation6], %s26
      %s28 = sshll.u32 [#allocation5], 4
      %s29 = int_to_ptr.vmem [resolvable:$true] %s28
      %34 = dma.hbm_to_vmem [thread:$0]  %s1, 512, %s29, [#allocation6], 128, 128, 8
    $region9: #{_linear_2d.1} parent=1 // pred_fallthru
      _
    // Predicated region
    $region10: #{_linear_2d.1} parent=1 // pred_check
      _
    $region11: #{_linear_2d.1} parent=1 // pred_check_branch
      %36 = sbr.rel (0) target = $region13
    $region12: #{_linear_2d.1} parent=1 // pred_region
      _
    $region13: #{_linear_2d.1} parent=1 // pred_fallthru
      _
    // Predicated region
    $region14: #{_linear_2d.1} parent=1 // pred_check
      _
    $region15: #{_linear_2d.1} parent=1 // pred_check_branch
      %38 = sbr.rel (0) target = $region17
    $region16: #{_linear_2d.1} parent=1 // pred_region
      %39 = dma.done [#allocation3], 256
    $region17: #{_linear_2d.1} parent=1 // pred_fallthru
      _
    // Predicated region
    $region18: #{_linear_2d.1} parent=1 // pred_check
      _
    $region19: #{_linear_2d.1} parent=1 // pred_check_branch
      %41 = sbr.rel (0) target = $region21
    $region20: #{_linear_2d.1} parent=1 // pred_region
      %42 = dma.done [#allocation6], 512
    $region21: #{_linear_2d.1} parent=1 // pred_fallthru
      _
    %v43 = vld [vmem:[#allocation2] sm:$0xff]
    %v44 = vld [vmem:[#allocation2 + $0x8] sm:$0xff]
    %v45 = vld [vmem:[#allocation5] sm:$0xff]
    %v46 = vld [vmem:[#allocation5 + $0x8] sm:$0xff]
    %v47 = vld [vmem:[#allocation5 + $0x10] sm:$0xff]
    %v48 = vld [vmem:[#allocation5 + $0x18] sm:$0xff]
    %v49 = vld [vmem:[%s2] sm:$0x1]
    %v51 = vlaneseq
    %v52 = vshrl.u32 %v51, 7
    %v53 = vsub.s32 0, %v52
    %v54 = vrot.slane %v49, %v53
    %vm56 = vcmask 261120
    %v58 = vsel %vm56, %v43, 0
    %v61 = vsel %vm56, %v44, 0
    %63 = vmatprep.subr.mxu0 0.0
    %64 = vmatpush1.msra.mxu0 0.0
    %65 = vmatprep.subr.mxu0 0.0
    %66 = vmatpush1.msra.mxu0 0.0
    %67 = vmatprep.subr.mxu0 0.0
    %68 = vmatpush1.msra.mxu0 0.0
    %69 = vmatprep.subr.mxu0 0.0
    %70 = vmatpush1.msra.mxu0 0.0
    %71 = vmatprep.subr.mxu0 0.0
    %72 = vmatpush1.msra.mxu0 0.0
    %73 = vmatprep.subr.mxu0 0.0
    %74 = vmatpush1.msra.mxu0 0.0
    %75 = vmatprep.subr.mxu0 0.0
    %76 = vmatpush1.msra.mxu0 0.0
    %77 = vmatprep.subr.mxu0 0.0
    %78 = vmatpush1.msra.mxu0 0.0
    %79 = vmatprep.subr.mxu0 0.0
    %80 = vmatpush1.msra.mxu0 0.0
    %81 = vmatprep.subr.mxu0 0.0
    %82 = vmatpush1.msra.mxu0 0.0
    %83 = vmatprep.subr.mxu0 0.0
    %84 = vmatpush1.msra.mxu0 0.0
    %85 = vmatprep.subr.mxu0 0.0
    %86 = vmatpush1.msra.mxu0 0.0
    %87 = vmatprep.subr.mxu0 0.0
    %88 = vmatpush1.msra.mxu0 %v48
    %89 = vmatprep.subr.mxu0 0.0
    %90 = vmatpush1.msra.mxu0 %v47
    %91 = vmatprep.subr.mxu0 0.0
    %92 = vmatpush1.msra.mxu0 %v46
    %93 = vmatprep.subr.mxu0 0.0
    %94 = vmatpush1.msra.mxu0 %v45
    %95 = vmatprep.subr.mxu0 0.0
    %96 = vmatpush2.msra.mxu0 0.0
    %97 = vmatprep.subr.mxu0 0.0
    %98 = vmatpush2.msra.mxu0 0.0
    %99 = vmatprep.subr.mxu0 0.0
    %100 = vmatpush2.msra.mxu0 0.0
    %101 = vmatprep.subr.mxu0 0.0
    %102 = vmatpush2.msra.mxu0 0.0
    %103 = vmatprep.subr.mxu0 0.0
    %104 = vmatpush2.msra.mxu0 0.0
    %105 = vmatprep.subr.mxu0 0.0
    %106 = vmatpush2.msra.mxu0 0.0
    %107 = vmatprep.subr.mxu0 0.0
    %108 = vmatpush2.msra.mxu0 0.0
    %109 = vmatprep.subr.mxu0 0.0
    %110 = vmatpush2.msra.mxu0 0.0
    %111 = vmatprep.subr.mxu0 0.0
    %112 = vmatpush2.msra.mxu0 0.0
    %113 = vmatprep.subr.mxu0 0.0
    %114 = vmatpush2.msra.mxu0 0.0
    %115 = vmatprep.subr.mxu0 0.0
    %116 = vmatpush2.msra.mxu0 0.0
    %117 = vmatprep.subr.mxu0 0.0
    %118 = vmatpush2.msra.mxu0 0.0
    %119 = vmatprep.subr.mxu0 0.0
    %120 = vmatpush2.msra.mxu0 0.0
    %121 = vmatprep.subr.mxu0 0.0
    %122 = vmatpush2.msra.mxu0 0.0
    %123 = vmatprep.subr.mxu0 0.0
    %124 = vmatpush2.msra.mxu0 0.0
    %125 = vmatprep.subr.mxu0 0.0
    %126 = vmatpush2.msra.mxu0 0.0
    %127 = vmatprep.mubr.f32.mxu0 0.0
    %128 = vmatmul.mubr.f32.gmra.mxu0 %v58
    %v129 = vpop.f32.mrf.mxu0
    %v130 = vadd.f32 %v54, %v129
    %v131 = vpop.f32.mrf.mxu0
    %132 = vmatprep.mubr.f32.mxu0 0.0
    %133 = vmatmul.mubr.f32.gmra.mxu0 %v61
    %v134 = vpop.f32.mrf.mxu0
    %v135 = vadd.f32 %v54, %v134
    %v136 = vpop.f32.mrf.mxu0
    %137 = vdwg.mxu0
    %138 = vst [vmem:[#allocation7] sm:$0xff] %v130
    %139 = vst [vmem:[#allocation7 + $0x8] sm:$0xff] %v135
    // Predicated region
    $region22: #{_linear_2d.1} parent=1 // pred_check
      _
    $region23: #{_linear_2d.1} parent=1 // pred_check_branch
      %141 = sbr.rel (0) target = $region25
    $region24: #{_linear_2d.1} parent=1 // pred_region
      %s143 = ssub.s32 256, 256
      %144 = vsyncadd [#allocation4], %s143
      %s145 = sshll.u32 [#allocation7], 4
      %s146 = int_to_ptr.vmem [resolvable:$true] %s145
      %151 = dma.vmem_to_hbm [thread:$0]  %s146, 256, %s3, [#allocation4], 128, 128, 8
    $region25: #{_linear_2d.1} parent=1 // pred_fallthru
      _
    // Predicated region
    $region26: #{_linear_2d.1} parent=1 // pred_check
      _
    $region27: #{_linear_2d.1} parent=1 // pred_check_branch
      %153 = sbr.rel (0) target = $region29
    $region28: #{_linear_2d.1} parent=1 // pred_region
      %154 = dma.done [#allocation4], 256
    $region29: #{_linear_2d.1} parent=1 // pred_fallthru
      _
    %155 = vsyncpa [#allocation3], 1
    %156 = vsyncpa [#allocation6], 1
    %157 = vsyncpa [#allocation4], 1

</llo_original>
